<compile_context>
chip_gen: v5e
topology: v5e:2x2
jax: 0.10.0
libtpu: 0.0.40
codegen_flags: <defaults>
</compile_context>

<pallas_src>
import jax
import jax.numpy as jnp
from jax.experimental import pallas as pl
from jax.experimental.pallas import tpu as pltpu


def _make_ce_kernel(n_rows, n_cols, tile_n, tile_c):
    mask_rows = (n_rows % tile_n) != 0
    mask_cols = (n_cols % tile_c) != 0

    def kernel(logits_ref, labels_ref, out_ref, m_sc, l_sc, p_sc):
        i = pl.program_id(0)  # row tile   (parallel)
        c = pl.program_id(1)  # class tile (reduction, innermost)

        @pl.when(c == 0)
        def _init():
            m_sc[...] = jnp.full_like(m_sc, -jnp.inf)
            l_sc[...] = jnp.zeros_like(l_sc)
            p_sc[...] = jnp.zeros_like(p_sc)

        logits_nat = logits_ref[...]              # (tn, tc) native dtype (bf16 ok)
        labels = labels_ref[...]                  # (tn, 1) int32

        # Tile-local column ids; shift labels / remaining-column count instead
        # of adding c*tile_c to a full (tn, tc) iota.
        local_cols = jax.lax.broadcasted_iota(jnp.int32, (tile_n, tile_c), 1)

        if mask_cols:  # only traced when C % tile_c != 0
            rem = n_cols - c * tile_c             # scalar
            logits_nat = jnp.where(local_cols < rem, logits_nat, -1e30)

        # ---- logit at the label index (label hits exactly one class tile) ----
        # Select + lane-reduce on the native tile: only one lane per row can be
        # non-zero, so the native-dtype sum is exact; cast the (tn,1) result.
        local_lab = labels - c * tile_c           # (tn, 1) int32
        picked_blk = jnp.sum(
            jnp.where(local_cols == local_lab, logits_nat, 0),
            axis=-1, keepdims=True).astype(jnp.float32)
        p_sc[...] += picked_blk

        # ---- online log-sum-exp across class tiles (f32 accumulation) ----
        blk_max = jnp.max(logits_nat, axis=-1, keepdims=True).astype(jnp.float32)
        m_new = jnp.maximum(m_sc[...], blk_max)
        alpha = jnp.exp(m_sc[...] - m_new)
        logits_f32 = logits_nat.astype(jnp.float32)  # only exp() needs f32
        l_sc[...] = alpha * l_sc[...] + jnp.sum(jnp.exp(logits_f32 - m_new),
                                                axis=-1, keepdims=True)
        m_sc[...] = m_new

        @pl.when(c == pl.num_programs(1) - 1)
        def _finalize():
            per_sample = (jnp.log(l_sc[...]) + m_sc[...]) - p_sc[...]   # (tn, 1)
            if mask_rows:
                # Padded rows may carry garbage/NaN through the scratch; the
                # select picks 0.0 for them regardless (vsel semantics).
                row_ids = jax.lax.broadcasted_iota(jnp.int32, (tile_n, 1), 0)
                per_sample = jnp.where(row_ids < (n_rows - i * tile_n),
                                       per_sample, 0.0)
            partial = jnp.sum(per_sample)
            # lane-dense (1,8,128) block -> unmasked store, one block per row tile
            out_ref[...] = jnp.full(out_ref.shape, partial, dtype=jnp.float32)

    return kernel


def _round_up(x, m):
    return ((x + m - 1) // m) * m


def _pick_tile_n(n, max_tn=256):
    """Row-tile size: multiple of 8, and >=2 row tiles when N > 8 (megacore)."""
    if n <= 8:
        return n
    return min(max_tn, _round_up(pl.cdiv(n, 2), 8), _round_up(n, 8))


def _pick_tile_c(c, max_tc=8192):
    """Class-tile size: prefer a 128-multiple divisor of C so the ragged-column
    mask compiles out entirely; otherwise fall back to max_tc + masking."""
    if c <= max_tc:
        return c
    tc = (max_tc // 128) * 128
    while tc >= 128:
        if c % tc == 0:
            return tc
        tc -= 128
    return max_tc


def batch_flip_val_loss(predicts, labels, *, tile_n=None, tile_c=None):
    """predicts: (N, C) float (any dtype), labels: (N,) int -> scalar mean CE."""
    n, c = predicts.shape
    labels2d = labels.astype(jnp.int32).reshape(n, 1)

    tn = tile_n if tile_n is not None else _pick_tile_n(n)
    tc = tile_c if tile_c is not None else _pick_tile_c(c)
    tn = min(tn, n)
    tc = min(tc, c)

    grid_n = pl.cdiv(n, tn)
    grid_c = pl.cdiv(c, tc)

    # Explicit scoped-VMEM budget sized from the chosen tiles:
    #   logits double-buffered + labels double-buffered + 3 scratch + out blocks.
    itemsize = predicts.dtype.itemsize
    vmem_bytes = (2 * tn * tc * itemsize      # logits blocks (double-buffered)
                  + 2 * tn * 4                # labels blocks
                  + 3 * tn * 4                # m / l / picked scratch
                  + 2 * 8 * 128 * 4)          # output blocks
    vmem_limit = int(min(max(vmem_bytes + (2 << 20), 16 << 20), 48 << 20))

    cost = pl.CostEstimate(
        flops=5 * n * c,
        transcendentals=n * c,
        bytes_accessed=n * c * itemsize + n * 4 + grid_n * 8 * 128 * 4,
    )

    partials = pl.pallas_call(
        _make_ce_kernel(n, c, tn, tc),
        out_shape=jax.ShapeDtypeStruct((grid_n, 8, 128), jnp.float32),
        grid_spec=pltpu.PrefetchScalarGridSpec(
            num_scalar_prefetch=0,
            grid=(grid_n, grid_c),
            in_specs=[
                pl.BlockSpec((tn, tc), lambda i, k: (i, k)),   # logits (native dtype)
                pl.BlockSpec((tn, 1), lambda i, k: (i, 0)),    # labels
            ],
            out_specs=pl.BlockSpec((1, 8, 128), lambda i, k: (i, 0, 0)),
            scratch_shapes=[pltpu.VMEM((tn, 1), jnp.float32)] * 3,  # m, l, picked
        ),
        compiler_params=pltpu.CompilerParams(
            dimension_semantics=("parallel", "arbitrary"),
            vmem_limit_bytes=vmem_limit),
        cost_estimate=cost,
    )(predicts, labels2d)

    # Cross-tile reduction + GLOBAL-N mean in plain XLA (tiny, keeps semantics
    # independent of tiling).
    return jnp.sum(partials[:, 0, 0]) / jnp.float32(n)


def _reference_ce(logits, labels):
    logits = logits.astype(jnp.float32)
    lse = jax.nn.logsumexp(logits, axis=-1)
    picked = jnp.take_along_axis(logits, labels[:, None], axis=-1)[:, 0]
    return jnp.mean(lse - picked)


if __name__ == "__main__":
    key = jax.random.PRNGKey(0)
    k1, k2, k3, k4, k5 = jax.random.split(key, 5)

    # Case 1: toy shape consistent with the module (single block, no masking).
    N, C = 8, 32
    predicts = jax.random.normal(k1, (N, C), dtype=jnp.float32)
    labels = jax.random.randint(k2, (N,), 0, C, dtype=jnp.int32)
    features = jax.random.normal(k3, (N, 64), dtype=jnp.float32)  # unused by forward
    indexs = jnp.arange(N, dtype=jnp.int32)                       # unused by forward

    loss = jax.block_until_ready(batch_flip_val_loss(predicts, labels))
    ref = _reference_ce(predicts, labels)
    assert jnp.allclose(loss, ref, atol=1e-5, rtol=1e-5), (loss, ref)

    # Case 2: ragged N/C with small tile overrides to exercise row/column masking,
    # the multi-tile grid, and the native-bf16 input path.
    N2, C2 = 20, 200
    p2 = jax.random.normal(k4, (N2, C2), dtype=jnp.float32).astype(jnp.bfloat16)
    l2 = jax.random.randint(k5, (N2,), 0, C2, dtype=jnp.int32)
    loss2 = jax.block_until_ready(batch_flip_val_loss(p2, l2, tile_n=8, tile_c=128))
    ref2 = _reference_ce(p2, l2)
    assert jnp.allclose(loss2, ref2, atol=1e-3, rtol=1e-3), (loss2, ref2)

    # Case 3: default tile-picker path (no overrides) with multi-row-tile grid.
    N3, C3 = 24, 160
    p3 = jax.random.normal(k3, (N3, C3), dtype=jnp.float32)
    l3 = jax.random.randint(k2, (N3,), 0, C3, dtype=jnp.int32)
    loss3 = jax.block_until_ready(batch_flip_val_loss(p3, l3))
    ref3 = _reference_ce(p3, l3)
    assert jnp.allclose(loss3, ref3, atol=1e-5, rtol=1e-5), (loss3, ref3)

    print("KERNEL_OK")
</pallas_src>

<mosaic_0001>
module attributes {stable_mosaic.version = 11 : i64} {
  func.func @kernel(%arg0: i32, %arg1: i32, %arg2: memref<8x32xf32, #tpu.memory_space<vmem>>, %arg3: memref<8x1xi32, #tpu.memory_space<vmem>>, %arg4: memref<1x8x128xf32, #tpu.memory_space<vmem>>, %arg5: memref<8x1xf32, #tpu.memory_space<vmem>>, %arg6: memref<8x1xf32, #tpu.memory_space<vmem>>, %arg7: memref<8x1xf32, #tpu.memory_space<vmem>>) attributes {dimension_semantics = [#tpu.dimension_semantics<parallel>, #tpu.dimension_semantics<arbitrary>], iteration_bounds = array<i64: 1, 1>, scalar_prefetch = 0 : i64, scratch_operands = 3 : i64, tpu.core_type = #tpu.core_type<tc>, window_params = [{transform_indices = @transform_0, window_bounds = array<i64: 8, 32>}, {transform_indices = @transform_1, window_bounds = array<i64: 8, 1>}, {transform_indices = @transform_2, window_bounds = array<i64: 1, 8, 128>}]} {
    %c0_i32 = arith.constant 0 : i32
    %0 = arith.cmpi eq, %arg1, %c0_i32 : i32
    %1 = arith.extui %0 : i1 to i32
    %c0_i32_0 = arith.constant 0 : i32
    %2 = arith.cmpi ne, %1, %c0_i32_0 : i32
    scf.if %2 {
      %cst_23 = arith.constant 0xFF800000 : f32
      %39 = vector.broadcast %cst_23 : f32 to vector<8x1xf32>
      %c0_24 = arith.constant 0 : index
      %c0_25 = arith.constant 0 : index
      %40 = vector.load %arg5[%c0_24, %c0_25] : memref<8x1xf32, #tpu.memory_space<vmem>>, vector<8x1xf32>
      tpu.vector_store %arg5[%c0_24, %c0_25], %39 {strides = array<i32>} : memref<8x1xf32, #tpu.memory_space<vmem>>, vector<8x1xf32>,
      %cst_26 = arith.constant 0.000000e+00 : f32
      %41 = vector.broadcast %cst_26 : f32 to vector<8x1xf32>
      %c0_27 = arith.constant 0 : index
      %c0_28 = arith.constant 0 : index
      %42 = vector.load %arg6[%c0_27, %c0_28] : memref<8x1xf32, #tpu.memory_space<vmem>>, vector<8x1xf32>
      tpu.vector_store %arg6[%c0_27, %c0_28], %41 {strides = array<i32>} : memref<8x1xf32, #tpu.memory_space<vmem>>, vector<8x1xf32>,
      %cst_29 = arith.constant 0.000000e+00 : f32
      %43 = vector.broadcast %cst_29 : f32 to vector<8x1xf32>
      %c0_30 = arith.constant 0 : index
      %c0_31 = arith.constant 0 : index
      %44 = vector.load %arg7[%c0_30, %c0_31] : memref<8x1xf32, #tpu.memory_space<vmem>>, vector<8x1xf32>
      tpu.vector_store %arg7[%c0_30, %c0_31], %43 {strides = array<i32>} : memref<8x1xf32, #tpu.memory_space<vmem>>, vector<8x1xf32>,
    } else {
    }
    %c0 = arith.constant 0 : index
    %c0_1 = arith.constant 0 : index
    %3 = vector.load %arg2[%c0, %c0_1] : memref<8x32xf32, #tpu.memory_space<vmem>>, vector<8x32xf32>
    %c0_2 = arith.constant 0 : index
    %c0_3 = arith.constant 0 : index
    %4 = vector.load %arg3[%c0_2, %c0_3] : memref<8x1xi32, #tpu.memory_space<vmem>>, vector<8x1xi32>
    %5 = tpu.iota {dimensions = array<i32: 1>} : vector<8x32xi32>
    %c32_i32 = arith.constant 32 : i32
    %6 = arith.muli %arg1, %c32_i32 : i32
    %7 = vector.broadcast %6 : i32 to vector<8x1xi32>
    %8 = arith.subi %4, %7 : vector<8x1xi32>
    %9 = vector.broadcast %8 : vector<8x1xi32> to vector<8x32xi32>
    %10 = arith.cmpi eq, %5, %9 : vector<8x32xi32>
    %c0_i32_4 = arith.constant 0 : i32
    %11 = arith.sitofp %c0_i32_4 : i32 to f32
    %12 = vector.broadcast %11 : f32 to vector<8x32xf32>
    %13 = arith.select %10, %3, %12 : vector<8x32xi1>, vector<8x32xf32>
    %cst = arith.constant dense<0.000000e+00> : vector<8xf32>
    %14 = vector.multi_reduction <add>, %13, %cst [1] : vector<8x32xf32> to vector<8xf32>
    %15 = vector.shape_cast %14 : vector<8xf32> to vector<8x1xf32>
    %c0_5 = arith.constant 0 : index
    %c0_6 = arith.constant 0 : index
    %16 = vector.load %arg7[%c0_5, %c0_6] : memref<8x1xf32, #tpu.memory_space<vmem>>, vector<8x1xf32>
    %17 = arith.addf %16, %15 : vector<8x1xf32>
    %c0_7 = arith.constant 0 : index
    %c0_8 = arith.constant 0 : index
    %18 = vector.load %arg7[%c0_7, %c0_8] : memref<8x1xf32, #tpu.memory_space<vmem>>, vector<8x1xf32>
    tpu.vector_store %arg7[%c0_7, %c0_8], %17 {strides = array<i32>} : memref<8x1xf32, #tpu.memory_space<vmem>>, vector<8x1xf32>,
    %cst_9 = arith.constant dense<0xFF800000> : vector<8xf32>
    %19 = vector.multi_reduction <maximumf>, %3, %cst_9 [1] : vector<8x32xf32> to vector<8xf32>
    %20 = vector.shape_cast %19 : vector<8xf32> to vector<8x1xf32>
    %c0_10 = arith.constant 0 : index
    %c0_11 = arith.constant 0 : index
    %21 = vector.load %arg5[%c0_10, %c0_11] : memref<8x1xf32, #tpu.memory_space<vmem>>, vector<8x1xf32>
    %22 = arith.maximumf %21, %20 : vector<8x1xf32>
    %c0_12 = arith.constant 0 : index
    %c0_13 = arith.constant 0 : index
    %23 = vector.load %arg5[%c0_12, %c0_13] : memref<8x1xf32, #tpu.memory_space<vmem>>, vector<8x1xf32>
    %24 = arith.subf %23, %22 : vector<8x1xf32>
    %25 = math.exp %24 : vector<8x1xf32>
    %c0_14 = arith.constant 0 : index
    %c0_15 = arith.constant 0 : index
    %26 = vector.load %arg6[%c0_14, %c0_15] : memref<8x1xf32, #tpu.memory_space<vmem>>, vector<8x1xf32>
    %27 = arith.mulf %25, %26 : vector<8x1xf32>
    %28 = vector.broadcast %22 : vector<8x1xf32> to vector<8x32xf32>
    %29 = arith.subf %3, %28 : vector<8x32xf32>
    %30 = math.exp %29 : vector<8x32xf32>
    %cst_16 = arith.constant dense<0.000000e+00> : vector<8xf32>
    %31 = vector.multi_reduction <add>, %30, %cst_16 [1] : vector<8x32xf32> to vector<8xf32>
    %32 = vector.shape_cast %31 : vector<8xf32> to vector<8x1xf32>
    %33 = arith.addf %27, %32 : vector<8x1xf32>
    %c0_17 = arith.constant 0 : index
    %c0_18 = arith.constant 0 : index
    %34 = vector.load %arg6[%c0_17, %c0_18] : memref<8x1xf32, #tpu.memory_space<vmem>>, vector<8x1xf32>
    tpu.vector_store %arg6[%c0_17, %c0_18], %33 {strides = array<i32>} : memref<8x1xf32, #tpu.memory_space<vmem>>, vector<8x1xf32>,
    %c0_19 = arith.constant 0 : index
    %c0_20 = arith.constant 0 : index
    %35 = vector.load %arg5[%c0_19, %c0_20] : memref<8x1xf32, #tpu.memory_space<vmem>>, vector<8x1xf32>
    tpu.vector_store %arg5[%c0_19, %c0_20], %22 {strides = array<i32>} : memref<8x1xf32, #tpu.memory_space<vmem>>, vector<8x1xf32>,
    %c0_i32_21 = arith.constant 0 : i32
    %36 = arith.cmpi eq, %arg1, %c0_i32_21 : i32
    %37 = arith.extui %36 : i1 to i32
    %c0_i32_22 = arith.constant 0 : i32
    %38 = arith.cmpi ne, %37, %c0_i32_22 : i32
    scf.if %38 {
      %c0_23 = arith.constant 0 : index
      %c0_24 = arith.constant 0 : index
      %39 = vector.load %arg6[%c0_23, %c0_24] : memref<8x1xf32, #tpu.memory_space<vmem>>, vector<8x1xf32>
      %40 = math.log %39 : vector<8x1xf32>
      %c0_25 = arith.constant 0 : index
      %c0_26 = arith.constant 0 : index
      %41 = vector.load %arg5[%c0_25, %c0_26] : memref<8x1xf32, #tpu.memory_space<vmem>>, vector<8x1xf32>
      %42 = arith.addf %40, %41 : vector<8x1xf32>
      %c0_27 = arith.constant 0 : index
      %c0_28 = arith.constant 0 : index
      %43 = vector.load %arg7[%c0_27, %c0_28] : memref<8x1xf32, #tpu.memory_space<vmem>>, vector<8x1xf32>
      %44 = arith.subf %42, %43 : vector<8x1xf32>
      %45 = vector.shape_cast %44 : vector<8x1xf32> to vector<1x8x1xf32>
      %cst_29 = arith.constant dense<0.000000e+00> : vector<1xf32>
      %46 = vector.multi_reduction <add>, %45, %cst_29 [1, 2] : vector<1x8x1xf32> to vector<1xf32>
      %47 = vector.shape_cast %46 : vector<1xf32> to vector<1x1x1xf32>
      %48 = vector.extract %47[0, 0, 0] : f32 from vector<1x1x1xf32>
      %49 = vector.broadcast %48 : f32 to vector<1x8x128xf32>
      %c0_30 = arith.constant 0 : index
      %c0_31 = arith.constant 0 : index
      %c0_32 = arith.constant 0 : index
      %50 = vector.load %arg4[%c0_30, %c0_31, %c0_32] : memref<1x8x128xf32, #tpu.memory_space<vmem>>, vector<1x8x128xf32>
      tpu.vector_store %arg4[%c0_30, %c0_31, %c0_32], %49 {strides = array<i32>} : memref<1x8x128xf32, #tpu.memory_space<vmem>>, vector<1x8x128xf32>,
    } else {
    }
    return
  }
  func.func @transform_0(%arg0: i32, %arg1: i32) -> (i32, i32) {
    %c0_i32 = arith.constant 0 : i32
    return %arg0, %arg1 : i32, i32
  }
  func.func @transform_1(%arg0: i32, %arg1: i32) -> (i32, i32) {
    %c0_i32 = arith.constant 0 : i32
    %c0_i32_0 = arith.constant 0 : i32
    return %arg0, %c0_i32 : i32, i32
  }
  func.func @transform_2(%arg0: i32, %arg1: i32) -> (i32, i32, i32) {
    %c0_i32 = arith.constant 0 : i32
    %c0_i32_0 = arith.constant 0 : i32
    %c0_i32_1 = arith.constant 0 : i32
    return %arg0, %c0_i32, %c0_i32_0 : i32, i32, i32
  }
}

</mosaic_0001>

<llo_original>
// kernel: tpu_custom_call.1
$region0: #{tpu_custom_call.1}
  #allocation0 [shape = 'u32[]', space=smem, size = 0x4, offset = 0x4, fixed_abs, tag = 'smem constant byte address 0x4 - core index']
  #allocation1 [shape = 'u32[72,128]{1,0:T(1,128)}', space=vmem, size = 0x9000, scoped, tag = 'internal scratch']
  #allocation2 [shape = 'f32[8,1]{1,0:T(8,128)}', space=vmem, size = 0x1000, scoped, tag = 'scratch operand']
  #allocation3 [shape = 'f32[8,1]{1,0:T(8,128)}', space=vmem, size = 0x1000, scoped, tag = 'scratch operand']
  #allocation4 [shape = 'f32[8,1]{1,0:T(8,128)}', space=vmem, size = 0x1000, scoped, tag = 'scratch operand']
  %s0 = inlined_call_operand.vmem [shape: f32[8,32], index: 0, kind: input, shape index: {}]
  %s1 = inlined_call_operand.vmem [shape: s32[8,1], index: 1, kind: input, shape index: {}]
  %s2 = inlined_call_operand.hbm [shape: f32[1,8,128], index: 2, kind: output, shape index: {}]
  %s3 = sld [smem:[#allocation0]]
  $region26: #{tpu_custom_call.1} parent=0
    _
  %s5 = ssub.s32 1, %s3
  %s6 = scalar_select 0, %s5, %s3
  $region1: #{tpu_custom_call.1} parent=0
    #allocation5 [shape = 'u8[4096]{0}', space=vmem, size = 0x1000, scoped, tag = 'output window, operand 0, single buffered']
    #allocation6 [shape = 's32[1]{0}', space=sflag, size = 0x4, scoped, tag = 'scoped memory for tpu_custom_call.1']
    %7 = vsyncpa [#allocation6], 0
    // Predicated region
    $region2: #{tpu_custom_call.1} parent=1 // pred_check
      _
    $region3: #{tpu_custom_call.1} parent=1 // pred_check_branch
      %9 = sbr.rel (0) target = $region5
    $region4: #{tpu_custom_call.1} parent=1 // pred_region
      _
    $region5: #{tpu_custom_call.1} parent=1 // pred_fallthru
      _
    // Predicated region
    $region6: #{tpu_custom_call.1} parent=1 // pred_check
      _
    $region7: #{tpu_custom_call.1} parent=1 // pred_check_branch
      %11 = sbr.rel (0) target = $region9
    $region8: #{tpu_custom_call.1} parent=1 // pred_region
      _
    $region9: #{tpu_custom_call.1} parent=1 // pred_fallthru
      _
    %p12 = scmp.eq.s32.totalorder 0, 0
    // Predicated region
    $region10: #{tpu_custom_call.1} parent=1 // pred_check
      %p13 = pneg %p12
    $region11: #{tpu_custom_call.1} parent=1 // pred_check_branch
      %15 = sbr.rel (%p13) target = $region13
    $region12: #{tpu_custom_call.1} parent=1 // pred_region
      %vm16 = vcmask 7168
      %17 = vst.msk [vmem:[#allocation2] sm:$0xff] %vm16, -inf
      %18 = vst.msk [vmem:[#allocation3] sm:$0xff] %vm16, 0.0
      %19 = vst.msk [vmem:[#allocation4] sm:$0xff] %vm16, 0.0
    $region13: #{tpu_custom_call.1} parent=1 // pred_fallthru
      _
    %v20 = vld [vmem:[%s0] sm:$0xff]
    %v21 = vld [vmem:[%s1] sm:$0xff]
    %v22 = vlaneseq
    %v23 = vand.u32 %v22, 127
    %s24 = smul.u32 0, 32
    %v25 = vstv %s24
    %v26 = vsub.s32 %v21, %v25
    %27 = vset.pattern.permute.xlu0 0
    %28 = vperm.xlu0 %27, %v26
    %v29 = vpop.permute.xlu0 %28
    %vm30 = vcmp.eq.s32.totalorder %v23, %v29
    %v31 = vsel %vm30, %v20, 0.0
    %vm32 = vcmask 261120
    %v33 = vsel %vm32, %v31, 0.0
    %34 = vadd.xlane.f32.xlu0 %v33
    %v35 = vpop.xlane.xlu0 %34
    %v36 = vld [vmem:[#allocation4] sm:$0xff]
    %v37 = vadd.f32 %v36, %v35
    %vm38 = vcmask 7168
    %39 = vst.msk [vmem:[#allocation4] sm:$0xff] %vm38, %v37
    %v40 = vsel %vm32, %v20, -inf
    %41 = vmax.xlane.f32.xlu0 %v40
    %v42 = vpop.xlane.xlu0 %41
    %v43 = vld [vmem:[#allocation2] sm:$0xff]
    %v44 = vmax.f32 %v43, %v42
    %v45 = vsub.f32 %v43, %v44
    %v46 = vmul.f32 %v45, 1.442695
    %v47 = vpow.pop %v46
    %v48 = vld [vmem:[#allocation3] sm:$0xff]
    %v49 = vmul.f32 %v47, %v48
    %51 = vset.pattern.permute.xlu0 0
    %52 = vperm.xlu0 %51, %v44
    %v53 = vpop.permute.xlu0 %52
    %v55 = vsub.f32 %v20, %v53
    %v56 = vmul.f32 %v55, 1.442695
    %v57 = vpow.pop %v56
    %v58 = vsel %vm32, %v57, 0.0
    %59 = vadd.xlane.f32.xlu0 %v58
    %v60 = vpop.xlane.xlu0 %59
    %v61 = vadd.f32 %v49, %v60
    %62 = vst.msk [vmem:[#allocation3] sm:$0xff] %vm38, %v61
    %63 = vst.msk [vmem:[#allocation2] sm:$0xff] %vm38, %v44
    // Predicated region
    $region14: #{tpu_custom_call.1} parent=1 // pred_check
      %p64 = pneg %p12
    $region15: #{tpu_custom_call.1} parent=1 // pred_check_branch
      %66 = sbr.rel (%p64) target = $region17
    $region16: #{tpu_custom_call.1} parent=1 // pred_region
      %v67 = vld [vmem:[#allocation3] sm:$0xff]
      %v68 = vlog2.pop %v67
      %v69 = vmul.f32 %v68, 0.6931472
      %v70 = vld [vmem:[#allocation2] sm:$0xff]
      %v71 = vadd.f32 %v69, %v70
      %v72 = vld [vmem:[#allocation4] sm:$0xff]
      %v73 = vsub.f32 %v71, %v72
      %v74 = vsel %vm38, %v73, 0.0
      %75 = vadd.xlane.f32.xlu0 %v74
      %v76 = vpop.xlane.xlu0 %75
      %v77 = vrot.slane %v76, 4
      %v78 = vadd.f32 %v76, %v77
      %v79 = vrot.slane %v78, 2
      %v80 = vadd.f32 %v78, %v79
      %v81 = vrot.slane %v80, 1
      %v82 = vadd.f32 %v80, %v81
      %s83 = vtos %v82
      %v84 = vstv %s83
      %85 = vst [vmem:[#allocation5] sm:$0xff] %v84
    $region17: #{tpu_custom_call.1} parent=1 // pred_fallthru
      _
    // Predicated region
    $region18: #{tpu_custom_call.1} parent=1 // pred_check
      _
    $region19: #{tpu_custom_call.1} parent=1 // pred_check_branch
      %87 = sbr.rel (0) target = $region21
    $region20: #{tpu_custom_call.1} parent=1 // pred_region
      %89 = vsyncadd [#allocation6], 0
      %s91 = sshll.u32 [#allocation5], 4
      %s92 = int_to_ptr.vmem [resolvable:$true] %s91
      %s93 = sshll.u32 %s2, 4
      %s94 = int_to_ptr.hbm [resolvable:$true] %s93
      %96 = dma.vmem_to_hbm [thread:$0]  %s92, 128, %s94, [#allocation6]
    $region21: #{tpu_custom_call.1} parent=1 // pred_fallthru
      _
    // Predicated region
    $region22: #{tpu_custom_call.1} parent=1 // pred_check
      _
    $region23: #{tpu_custom_call.1} parent=1 // pred_check_branch
      %98 = sbr.rel (0) target = $region25
    $region24: #{tpu_custom_call.1} parent=1 // pred_region
      %100 = dma.done [#allocation6], 128
    $region25: #{tpu_custom_call.1} parent=1 // pred_fallthru
      _
    %101 = vsyncpa [#allocation6], 1

</llo_original>
